<compile_context>
chip_gen: v6e
topology: v6e:2x2x1
jax: 0.10.0
libtpu: 0.0.40
codegen_flags: <defaults>
</compile_context>

<pallas_src>
import jax
import jax.numpy as jnp
from jax.experimental import pallas as pl
from jax.experimental.pallas import tpu as pltpu

_LANES = 128
_TILE_BYTES = 2 * 1024 * 1024          # ~2 MiB per streamed block
_SINGLE_BLOCK_BYTES = 2 * 1024 * 1024  # threshold for the no-grid path


def _pack_factor(dtype) -> int:
    """Native sublane pack factor: 8 (32-bit), 16 (bf16), 32 (int8/fp8)."""
    itemsize = jnp.dtype(dtype).itemsize
    return max(8, 32 // itemsize)


def _padded_vmem_bytes(shape, dtype) -> int:
    """VMEM bytes of `shape` once padded to its native (pack, 128) tiling."""
    itemsize = jnp.dtype(dtype).itemsize
    pack = _pack_factor(dtype)
    dims = list(shape)
    if len(dims) < 2:
        dims = [1] * (2 - len(dims)) + dims
    dims[-1] = pl.cdiv(dims[-1], _LANES) * _LANES
    dims[-2] = pl.cdiv(dims[-2], pack) * pack
    total = itemsize
    for d in dims:
        total *= int(d)
    return total


def _relu_sub_kernel(x_ref, o_ref):
    x = x_ref[...]
    two = jnp.asarray(2, dtype=x.dtype)
    zero = jnp.asarray(0, dtype=x.dtype)
    # v3 = relu(x1 - 2)   (v1 = relu(x1) is dead code in the reference)
    o_ref[...] = jnp.maximum(x - two, zero)


def model_forward(x1: jax.Array, *, allow_xla_fast_path: bool = False) -> jax.Array:
    orig_shape = x1.shape
    dtype = x1.dtype
    n = x1.size
    itemsize = jnp.dtype(dtype).itemsize

    # Production fast path for tiny tensors (plain fused XLA beats any kernel
    # launch).  Disabled by default so the Pallas kernel is exercised here.
    if allow_xla_fast_path and n * itemsize < 256 * 1024:
        return jnp.maximum(x1 - jnp.asarray(2, dtype), jnp.asarray(0, dtype))

    # ---- small/medium inputs: one full-extent block, no grid --------------
    if _padded_vmem_bytes(orig_shape, dtype) <= _SINGLE_BLOCK_BYTES:
        return pl.pallas_call(
            _relu_sub_kernel,
            out_shape=jax.ShapeDtypeStruct(orig_shape, dtype),
        )(x1)

    # ---- large inputs: lane-dense (rows, 128) HBM streaming ---------------
    pack = _pack_factor(dtype)
    chunk = pack * _LANES
    n_pad = pl.cdiv(n, chunk) * chunk
    rows = n_pad // _LANES

    max_tile_rows = max(pack, (_TILE_BYTES // (_LANES * itemsize)) // pack * pack)
    tile_rows = min(max_tile_rows, rows)
    grid = (pl.cdiv(rows, tile_rows),)  # ragged last block is clamped by Pallas

    xf = jnp.ravel(x1)
    if n_pad != n:
        # Safe: relu(0 - 2) = 0 and the padded tail is sliced off below.
        xf = jnp.pad(xf, (0, n_pad - n))
    x2d = xf.reshape(rows, _LANES)

    out2d = pl.pallas_call(
        _relu_sub_kernel,
        out_shape=jax.ShapeDtypeStruct((rows, _LANES), dtype),
        grid=grid,
        in_specs=[pl.BlockSpec((tile_rows, _LANES), lambda i: (i, 0))],
        out_specs=pl.BlockSpec((tile_rows, _LANES), lambda i: (i, 0)),
        compiler_params=pltpu.CompilerParams(
            # On v7x, pltpu.CORE_PARALLEL here would shard the stream across
            # both TensorCores; "parallel" kept for portability across gens.
            dimension_semantics=("parallel",),
        ),
    )(x2d)

    if n_pad != n:
        return out2d.reshape(-1)[:n].reshape(orig_shape)
    return out2d.reshape(orig_shape)


if __name__ == "__main__":
    key = jax.random.PRNGKey(0)
    fwd = jax.jit(model_forward)

    # 1) Reference shape from the PyTorch script: (1, 2, 2, 3) -> single-block path.
    x_small = jax.random.normal(key, (1, 2, 2, 3), dtype=jnp.float32)
    out_small = fwd(x_small)
    jax.block_until_ready(out_small)
    assert out_small.shape == (1, 2, 2, 3)
    assert jnp.allclose(out_small, jnp.maximum(x_small - 2.0, 0.0), atol=1e-6)

    # 2) Larger, lane-aligned shape -> tiled streaming path (no pad needed).
    k2, k3 = jax.random.split(key)
    x_big = jax.random.normal(k2, (8, 16, 64, 96), dtype=jnp.float32)
    out_big = fwd(x_big)
    jax.block_until_ready(out_big)
    assert jnp.allclose(out_big, jnp.maximum(x_big - 2.0, 0.0), atol=1e-6)

    # 3) Ragged shape -> tiled streaming path with tail padding + slice.
    x_rag = jax.random.normal(k3, (3, 11, 129, 131), dtype=jnp.float32)
    out_rag = fwd(x_rag)
    jax.block_until_ready(out_rag)
    assert jnp.allclose(out_rag, jnp.maximum(x_rag - 2.0, 0.0), atol=1e-6)

    print("KERNEL_OK")
</pallas_src>

<mosaic_0001>
module attributes {stable_mosaic.version = 11 : i64} {
  func.func @_relu_sub_kernel(%arg0: memref<1x2x2x3xf32, #tpu.memory_space<vmem>>, %arg1: memref<1x2x2x3xf32, #tpu.memory_space<vmem>>) attributes {dimension_semantics = [], scalar_prefetch = 0 : i64, scratch_operands = 0 : i64, tpu.core_type = #tpu.core_type<tc>} {
    %c0 = arith.constant 0 : index
    %c0_0 = arith.constant 0 : index
    %c0_1 = arith.constant 0 : index
    %c0_2 = arith.constant 0 : index
    %0 = vector.load %arg0[%c0, %c0_0, %c0_1, %c0_2] : memref<1x2x2x3xf32, #tpu.memory_space<vmem>>, vector<1x2x2x3xf32>
    %cst = arith.constant 2.000000e+00 : f32
    %1 = vector.broadcast %cst : f32 to vector<1x2x2x3xf32>
    %2 = arith.subf %0, %1 : vector<1x2x2x3xf32>
    %cst_3 = arith.constant 0.000000e+00 : f32
    %3 = vector.broadcast %cst_3 : f32 to vector<1x2x2x3xf32>
    %4 = arith.maximumf %2, %3 : vector<1x2x2x3xf32>
    %c0_4 = arith.constant 0 : index
    %c0_5 = arith.constant 0 : index
    %c0_6 = arith.constant 0 : index
    %c0_7 = arith.constant 0 : index
    %5 = vector.load %arg1[%c0_4, %c0_5, %c0_6, %c0_7] : memref<1x2x2x3xf32, #tpu.memory_space<vmem>>, vector<1x2x2x3xf32>
    tpu.vector_store %arg1[%c0_4, %c0_5, %c0_6, %c0_7], %4 {strides = array<i32>} : memref<1x2x2x3xf32, #tpu.memory_space<vmem>>, vector<1x2x2x3xf32>,
    return
  }
}

</mosaic_0001>

<llo_original>
// kernel: model_forward.1
$region0: #{model_forward.1}
  #allocation0 [shape = 'u32[]', space=smem, size = 0x4, offset = 0x4, fixed_abs, tag = 'smem constant byte address 0x4 - core index']
  #allocation1 [shape = 'u32[144,128]{1,0:T(1,128)}', space=vmem, size = 0x12000, scoped, tag = 'internal scratch']
  %s0 = inlined_call_operand.hbm [shape: f32[1,2,2,3], index: 0, kind: input, shape index: {}]
  %s1 = inlined_call_operand.hbm [shape: f32[1,2,2,3], index: 1, kind: output, shape index: {}]
  %s2 = sld [smem:[#allocation0]]
  $region18: #{model_forward.1} parent=0
    _
  %s4 = ssub.s32 1, %s2
  %s5 = scalar_select 0, %s4, %s2
  $region1: #{model_forward.1} parent=0
    #allocation2 [shape = 'u8[2048]{0}', space=vmem, size = 0x800, scoped, tag = 'input window, operand 0, single buffered']
    #allocation3 [shape = 's32[1]{0}', space=sflag, size = 0x4, scoped, tag = 'scoped memory for model_forward.1']
    #allocation4 [shape = 's32[1]{0}', space=sflag, size = 0x4, scoped, tag = 'scoped memory for model_forward.1']
    #allocation5 [shape = 'u8[2048]{0}', space=vmem, size = 0x800, scoped, tag = 'output window, operand 0, single buffered']
    %6 = vsyncpa [#allocation3], 0
    %7 = vsyncpa [#allocation4], 0
    // Predicated region
    $region2: #{model_forward.1} parent=1 // pred_check
      _
    $region3: #{model_forward.1} parent=1 // pred_check_branch
      %9 = sbr.rel (0) target = $region5
    $region4: #{model_forward.1} parent=1 // pred_region
      %s11 = ssub.s32 64, 64
      %12 = vsyncadd [#allocation3], %s11
      %s13 = sshll.u32 [#allocation2], 4
      %s14 = int_to_ptr.vmem [resolvable:$true] %s13
      %19 = dma.hbm_to_vmem [thread:$0]  %s0, 64, %s14, [#allocation3], 32, 32, 2
    $region5: #{model_forward.1} parent=1 // pred_fallthru
      _
    // Predicated region
    $region6: #{model_forward.1} parent=1 // pred_check
      _
    $region7: #{model_forward.1} parent=1 // pred_check_branch
      %21 = sbr.rel (0) target = $region9
    $region8: #{model_forward.1} parent=1 // pred_region
      %22 = dma.done [#allocation3], 64
    $region9: #{model_forward.1} parent=1 // pred_fallthru
      _
    %v23 = vld [vmem:[#allocation2] sm:$0x3]
    %v24 = vld [vmem:[#allocation2 + $0x2] sm:$0x3]
    %v25 = vsub.f32 %v23, 2.0
    %v26 = vsub.f32 %v24, 2.0
    %v27 = vmax.f32 %v25, 0.0
    %v28 = vmax.f32 %v26, 0.0
    %vm29 = vcmask 17408
    %30 = vst.msk [vmem:[#allocation5] sm:$0x3] %vm29, %v27
    %31 = vst.msk [vmem:[#allocation5 + $0x2] sm:$0x3] %vm29, %v28
    // Predicated region
    $region10: #{model_forward.1} parent=1 // pred_check
      _
    $region11: #{model_forward.1} parent=1 // pred_check_branch
      %33 = sbr.rel (0) target = $region13
    $region12: #{model_forward.1} parent=1 // pred_region
      %s35 = ssub.s32 64, 64
      %36 = vsyncadd [#allocation4], %s35
      %s37 = sshll.u32 [#allocation5], 4
      %s38 = int_to_ptr.vmem [resolvable:$true] %s37
      %43 = dma.vmem_to_hbm [thread:$0]  %s38, 64, %s1, [#allocation4], 32, 32, 2
    $region13: #{model_forward.1} parent=1 // pred_fallthru
      _
    // Predicated region
    $region14: #{model_forward.1} parent=1 // pred_check
      _
    $region15: #{model_forward.1} parent=1 // pred_check_branch
      %45 = sbr.rel (0) target = $region17
    $region16: #{model_forward.1} parent=1 // pred_region
      %46 = dma.done [#allocation4], 64
    $region17: #{model_forward.1} parent=1 // pred_fallthru
      _
    %47 = vsyncpa [#allocation3], 1
    %48 = vsyncpa [#allocation4], 1

</llo_original>
